<compile_context>
chip_gen: v7x
topology: tpu7x:2x2x1
jax: 0.10.0
libtpu: 0.0.40
codegen_flags: <defaults>
</compile_context>

<pallas_src>
import math

import jax
import jax.numpy as jnp
from jax.experimental import pallas as pl
from jax.experimental.pallas import tpu as pltpu

LANE = 128
IN_DIM = 28 * 28          # 784
OUT_DIM = 10


def _cdiv(a, b):
    return (a + b - 1) // b


def _round_up(x, m):
    return _cdiv(x, m) * m


def mlp_kernel(x_ref,
               w1_ref, b1_ref,
               w2_ref, b2_ref,
               w3_ref, b3_ref,
               w4_ref, b4_ref,
               o_ref):
    """Fused 4-layer MLP on one batch tile: (linear + ReLU) x 3 + final linear.

    x tile arrives f32 and is cast to bf16 here; weights are bf16, biases f32,
    every matmul accumulates in f32 on the MXU.  All hidden widths are
    lane-padded to 128 with zeros (exact math), only the 10 real logit lanes
    are stored.
    """
    x = x_ref[...].astype(jnp.bfloat16)   # per-tile cast, hidden under the DMA

    h = jnp.dot(x, w1_ref[...], preferred_element_type=jnp.float32)
    h = jnp.maximum(h + b1_ref[...], 0.0)

    h = jnp.dot(h.astype(jnp.bfloat16), w2_ref[...],
                preferred_element_type=jnp.float32)
    h = jnp.maximum(h + b2_ref[...], 0.0)

    h = jnp.dot(h.astype(jnp.bfloat16), w3_ref[...],
                preferred_element_type=jnp.float32)
    h = jnp.maximum(h + b3_ref[...], 0.0)

    h = jnp.dot(h.astype(jnp.bfloat16), w4_ref[...],
                preferred_element_type=jnp.float32)
    # Only the first OUT_DIM lanes are real logits; store them directly so the
    # HBM writeback is (TM, 10) f32 instead of a 12.8x-amplified (TM, 128) slab.
    o_ref[...] = (h[:, :OUT_DIM] + b4_ref[:, :OUT_DIM]).astype(o_ref.dtype)


def mlp_forward(x, padded_params, *, tm=1024):
    """x: (..., 1, 28, 28) or (..., 784), f32.  Returns f32 logits (B, 10)."""
    x2d = x.reshape(-1, IN_DIM)           # contiguous reshape, no HBM copy
    B = x2d.shape[0]

    # Batch tile: big (default 1024 rows) to amortise per-step overhead, but
    # split into >=2 tiles when possible so v7x's two TensorCores both get work.
    if B <= 8:
        TM = B                            # full-dim block, no sublane constraint
    else:
        TM = min(tm, _round_up(_cdiv(B, 2), 8))
    grid = (_cdiv(B, TM),)                # ragged last tile handled by Pallas

    (w1, b1), (w2, b2), (w3, b3), (w4, b4) = padded_params

    x_spec = pl.BlockSpec((TM, IN_DIM), lambda i: (i, 0))
    out_spec = pl.BlockSpec((TM, OUT_DIM), lambda i: (i, 0))

    def pinned(arr):
        # Same block every grid step -> stays resident in VMEM, no re-DMA.
        return pl.BlockSpec(arr.shape, lambda i: (0, 0))

    in_specs = [
        x_spec,
        pinned(w1), pinned(b1),
        pinned(w2), pinned(b2),
        pinned(w3), pinned(b3),
        pinned(w4), pinned(b4),
    ]

    weight_bytes = 0
    for w, b in padded_params:
        weight_bytes += int(w.size) * w.dtype.itemsize
        weight_bytes += int(b.size) * b.dtype.itemsize

    flops = 2 * B * (IN_DIM * LANE + 3 * LANE * LANE)
    bytes_accessed = (
        B * IN_DIM * 4          # f32 x, read exactly once
        + weight_bytes          # resident bf16 weights / f32 biases
        + B * OUT_DIM * 4       # f32 logits
    )

    # Double-buffered f32 x tiles + (lane-padded) output buffers + weights.
    vmem_need = 2 * TM * IN_DIM * 4 + 2 * TM * LANE * 4 + weight_bytes
    vmem_limit = int(min(max(2 * vmem_need, 32 << 20), 48 << 20))

    return pl.pallas_call(
        mlp_kernel,
        out_shape=jax.ShapeDtypeStruct((B, OUT_DIM), jnp.float32),
        grid=grid,
        in_specs=in_specs,
        out_specs=out_spec,
        compiler_params=pltpu.CompilerParams(
            dimension_semantics=("parallel",),
            vmem_limit_bytes=vmem_limit),
        cost_estimate=pl.CostEstimate(
            flops=flops, transcendentals=0, bytes_accessed=bytes_accessed),
    )(x2d, w1, b1, w2, b2, w3, b3, w4, b4)


def init_linear(key, fan_in, fan_out):
    """nn.Linear-style init: U(-1/sqrt(fan_in), 1/sqrt(fan_in)).

    Weight stored transposed vs. PyTorch: (fan_in, fan_out) so each layer is
    x @ W + b (== x @ W_pt.T + b).
    """
    kw, kb = jax.random.split(key)
    bound = 1.0 / math.sqrt(fan_in)
    w = jax.random.uniform(kw, (fan_in, fan_out), jnp.float32, -bound, bound)
    b = jax.random.uniform(kb, (fan_out,), jnp.float32, -bound, bound)
    return w, b


def pad_params(params):
    """Zero-pad in/out dims to multiples of 128 (784 input dim stays as-is),
    cast weights to bf16, keep biases f32 as (1, Np) rows.  Zero padding keeps
    the math exact: padded activation lanes are 0 and padded weight rows are 0."""
    padded = []
    for li, (w, b) in enumerate(params):
        fi, fo = w.shape
        fi_p = fi if li == 0 else _round_up(fi, LANE)
        fo_p = _round_up(fo, LANE)
        w_p = (jnp.zeros((fi_p, fo_p), jnp.float32)
               .at[:fi, :fo].set(w)
               .astype(jnp.bfloat16))
        b_p = jnp.zeros((1, fo_p), jnp.float32).at[:, :fo].set(b)
        padded.append((w_p, b_p))
    return tuple(padded)


def ref_forward(x, params):
    """Pure-JAX reference with the same mixed precision as the kernel
    (bf16 operands, f32 accumulation, true unpadded widths)."""
    h = x.reshape(-1, IN_DIM).astype(jnp.bfloat16)
    n = len(params)
    for i, (w, b) in enumerate(params):
        h = jnp.dot(h, w.astype(jnp.bfloat16),
                    preferred_element_type=jnp.float32) + b
        if i < n - 1:
            h = jnp.maximum(h, 0.0).astype(jnp.bfloat16)
    return h


if __name__ == "__main__":
    root = jax.random.PRNGKey(0)
    k_in, k_in2, k1, k2, k3, k4 = jax.random.split(root, 6)

    params = (
        init_linear(k1, IN_DIM, 128),
        init_linear(k2, 128, 88),
        init_linear(k3, 88, 64),
        init_linear(k4, 64, OUT_DIM),
    )
    padded_params = pad_params(params)

    fwd = jax.jit(mlp_forward)

    # Small MNIST-like batch: NCHW (2, 1, 28, 28); forward flattens to (2, 784).
    x = jax.random.normal(k_in, (2, 1, 28, 28), jnp.float32)
    logits = fwd(x, padded_params)
    jax.block_until_ready(logits)
    assert logits.shape == (2, OUT_DIM)
    ref = ref_forward(x, params)
    assert jnp.allclose(logits, ref, atol=2e-3, rtol=2e-3), (
        float(jnp.max(jnp.abs(logits - ref))))

    # Larger, ragged batch: exercises the multi-tile grid (both v7x TCs get a
    # tile) and the partial last tile — with no wrapper-side pad/copy of x.
    x2 = jax.random.normal(k_in2, (300, 1, 28, 28), jnp.float32)
    logits2 = fwd(x2, padded_params)
    jax.block_until_ready(logits2)
    assert logits2.shape == (300, OUT_DIM)
    ref2 = ref_forward(x2, params)
    assert jnp.allclose(logits2, ref2, atol=2e-3, rtol=2e-3), (
        float(jnp.max(jnp.abs(logits2 - ref2))))

    print("KERNEL_OK")
</pallas_src>

<mosaic_0001>
module attributes {stable_mosaic.version = 11 : i64} {
  func.func @mlp_kernel(%arg0: i32, %arg1: memref<2x784xf32, #tpu.memory_space<vmem>>, %arg2: memref<784x128xbf16, #tpu.memory_space<vmem>>, %arg3: memref<1x128xf32, #tpu.memory_space<vmem>>, %arg4: memref<128x128xbf16, #tpu.memory_space<vmem>>, %arg5: memref<1x128xf32, #tpu.memory_space<vmem>>, %arg6: memref<128x128xbf16, #tpu.memory_space<vmem>>, %arg7: memref<1x128xf32, #tpu.memory_space<vmem>>, %arg8: memref<128x128xbf16, #tpu.memory_space<vmem>>, %arg9: memref<1x128xf32, #tpu.memory_space<vmem>>, %arg10: memref<2x10xf32, #tpu.memory_space<vmem>>) attributes {dimension_semantics = [#tpu.dimension_semantics<parallel>], iteration_bounds = array<i64: 1>, scalar_prefetch = 0 : i64, scratch_operands = 0 : i64, tpu.core_type = #tpu.core_type<tc>, window_params = [{transform_indices = @transform_0, window_bounds = array<i64: 2, 784>}, {pipeline_mode = #tpu.pipeline_mode<synchronous>, transform_indices = @transform_1, window_bounds = array<i64: 784, 128>}, {pipeline_mode = #tpu.pipeline_mode<synchronous>, transform_indices = @transform_2, window_bounds = array<i64: 1, 128>}, {pipeline_mode = #tpu.pipeline_mode<synchronous>, transform_indices = @transform_3, window_bounds = array<i64: 128, 128>}, {pipeline_mode = #tpu.pipeline_mode<synchronous>, transform_indices = @transform_4, window_bounds = array<i64: 1, 128>}, {pipeline_mode = #tpu.pipeline_mode<synchronous>, transform_indices = @transform_5, window_bounds = array<i64: 128, 128>}, {pipeline_mode = #tpu.pipeline_mode<synchronous>, transform_indices = @transform_6, window_bounds = array<i64: 1, 128>}, {pipeline_mode = #tpu.pipeline_mode<synchronous>, transform_indices = @transform_7, window_bounds = array<i64: 128, 128>}, {pipeline_mode = #tpu.pipeline_mode<synchronous>, transform_indices = @transform_8, window_bounds = array<i64: 1, 128>}, {transform_indices = @transform_9, window_bounds = array<i64: 2, 10>}]} {
    %c0 = arith.constant 0 : index
    %c0_0 = arith.constant 0 : index
    %0 = vector.load %arg1[%c0, %c0_0] : memref<2x784xf32, #tpu.memory_space<vmem>>, vector<2x784xf32>
    %1 = arith.truncf %0 : vector<2x784xf32> to vector<2x784xbf16>
    %c0_1 = arith.constant 0 : index
    %c0_2 = arith.constant 0 : index
    %2 = vector.load %arg2[%c0_1, %c0_2] : memref<784x128xbf16, #tpu.memory_space<vmem>>, vector<784x128xbf16>
    %cst = arith.constant dense<0.000000e+00> : vector<2x128xf32>
    %3 = tpu.matmul %1, %2, %cst {dimension_numbers = #tpu.dot_dimension_numbers<[1], [0], [0], [1], [0, 0, 1, 1], [], []>} : vector<2x784xbf16>, vector<784x128xbf16>, vector<2x128xf32> -> vector<2x128xf32>
    %c0_3 = arith.constant 0 : index
    %c0_4 = arith.constant 0 : index
    %4 = vector.load %arg3[%c0_3, %c0_4] : memref<1x128xf32, #tpu.memory_space<vmem>>, vector<1x128xf32>
    %5 = vector.broadcast %4 : vector<1x128xf32> to vector<2x128xf32>
    %6 = arith.addf %3, %5 : vector<2x128xf32>
    %cst_5 = arith.constant 0.000000e+00 : f32
    %7 = vector.broadcast %cst_5 : f32 to vector<2x128xf32>
    %8 = arith.maximumf %6, %7 : vector<2x128xf32>
    %9 = arith.truncf %8 : vector<2x128xf32> to vector<2x128xbf16>
    %c0_6 = arith.constant 0 : index
    %c0_7 = arith.constant 0 : index
    %10 = vector.load %arg4[%c0_6, %c0_7] : memref<128x128xbf16, #tpu.memory_space<vmem>>, vector<128x128xbf16>
    %cst_8 = arith.constant dense<0.000000e+00> : vector<2x128xf32>
    %11 = tpu.matmul %9, %10, %cst_8 {dimension_numbers = #tpu.dot_dimension_numbers<[1], [0], [0], [1], [0, 0, 1, 1], [], []>} : vector<2x128xbf16>, vector<128x128xbf16>, vector<2x128xf32> -> vector<2x128xf32>
    %c0_9 = arith.constant 0 : index
    %c0_10 = arith.constant 0 : index
    %12 = vector.load %arg5[%c0_9, %c0_10] : memref<1x128xf32, #tpu.memory_space<vmem>>, vector<1x128xf32>
    %13 = vector.broadcast %12 : vector<1x128xf32> to vector<2x128xf32>
    %14 = arith.addf %11, %13 : vector<2x128xf32>
    %cst_11 = arith.constant 0.000000e+00 : f32
    %15 = vector.broadcast %cst_11 : f32 to vector<2x128xf32>
    %16 = arith.maximumf %14, %15 : vector<2x128xf32>
    %17 = arith.truncf %16 : vector<2x128xf32> to vector<2x128xbf16>
    %c0_12 = arith.constant 0 : index
    %c0_13 = arith.constant 0 : index
    %18 = vector.load %arg6[%c0_12, %c0_13] : memref<128x128xbf16, #tpu.memory_space<vmem>>, vector<128x128xbf16>
    %cst_14 = arith.constant dense<0.000000e+00> : vector<2x128xf32>
    %19 = tpu.matmul %17, %18, %cst_14 {dimension_numbers = #tpu.dot_dimension_numbers<[1], [0], [0], [1], [0, 0, 1, 1], [], []>} : vector<2x128xbf16>, vector<128x128xbf16>, vector<2x128xf32> -> vector<2x128xf32>
    %c0_15 = arith.constant 0 : index
    %c0_16 = arith.constant 0 : index
    %20 = vector.load %arg7[%c0_15, %c0_16] : memref<1x128xf32, #tpu.memory_space<vmem>>, vector<1x128xf32>
    %21 = vector.broadcast %20 : vector<1x128xf32> to vector<2x128xf32>
    %22 = arith.addf %19, %21 : vector<2x128xf32>
    %cst_17 = arith.constant 0.000000e+00 : f32
    %23 = vector.broadcast %cst_17 : f32 to vector<2x128xf32>
    %24 = arith.maximumf %22, %23 : vector<2x128xf32>
    %25 = arith.truncf %24 : vector<2x128xf32> to vector<2x128xbf16>
    %c0_18 = arith.constant 0 : index
    %c0_19 = arith.constant 0 : index
    %26 = vector.load %arg8[%c0_18, %c0_19] : memref<128x128xbf16, #tpu.memory_space<vmem>>, vector<128x128xbf16>
    %cst_20 = arith.constant dense<0.000000e+00> : vector<2x128xf32>
    %27 = tpu.matmul %25, %26, %cst_20 {dimension_numbers = #tpu.dot_dimension_numbers<[1], [0], [0], [1], [0, 0, 1, 1], [], []>} : vector<2x128xbf16>, vector<128x128xbf16>, vector<2x128xf32> -> vector<2x128xf32>
    %28 = vector.extract_strided_slice %27 {offsets = [0, 0], sizes = [2, 10], strides = [1, 1]} : vector<2x128xf32> to vector<2x10xf32>
    %c0_21 = arith.constant 0 : index
    %c0_22 = arith.constant 0 : index
    %29 = vector.load %arg9[%c0_21, %c0_22] : memref<1x128xf32, #tpu.memory_space<vmem>>, vector<1x10xf32>
    %30 = vector.broadcast %29 : vector<1x10xf32> to vector<2x10xf32>
    %31 = arith.addf %28, %30 : vector<2x10xf32>
    %c0_23 = arith.constant 0 : index
    %c0_24 = arith.constant 0 : index
    %32 = vector.load %arg10[%c0_23, %c0_24] : memref<2x10xf32, #tpu.memory_space<vmem>>, vector<2x10xf32>
    tpu.vector_store %arg10[%c0_23, %c0_24], %31 {strides = array<i32>} : memref<2x10xf32, #tpu.memory_space<vmem>>, vector<2x10xf32>,
    return
  }
  func.func @transform_0(%arg0: i32) -> (i32, i32) {
    %c0_i32 = arith.constant 0 : i32
    %c0_i32_0 = arith.constant 0 : i32
    return %arg0, %c0_i32 : i32, i32
  }
  func.func @transform_1(%arg0: i32) -> (i32, i32) {
    %c0_i32 = arith.constant 0 : i32
    %c0_i32_0 = arith.constant 0 : i32
    %c0_i32_1 = arith.constant 0 : i32
    return %c0_i32, %c0_i32_0 : i32, i32
  }
  func.func @transform_2(%arg0: i32) -> (i32, i32) {
    %c0_i32 = arith.constant 0 : i32
    %c0_i32_0 = arith.constant 0 : i32
    %c0_i32_1 = arith.constant 0 : i32
    return %c0_i32, %c0_i32_0 : i32, i32
  }
  func.func @transform_3(%arg0: i32) -> (i32, i32) {
    %c0_i32 = arith.constant 0 : i32
    %c0_i32_0 = arith.constant 0 : i32
    %c0_i32_1 = arith.constant 0 : i32
    return %c0_i32, %c0_i32_0 : i32, i32
  }
  func.func @transform_4(%arg0: i32) -> (i32, i32) {
    %c0_i32 = arith.constant 0 : i32
    %c0_i32_0 = arith.constant 0 : i32
    %c0_i32_1 = arith.constant 0 : i32
    return %c0_i32, %c0_i32_0 : i32, i32
  }
  func.func @transform_5(%arg0: i32) -> (i32, i32) {
    %c0_i32 = arith.constant 0 : i32
    %c0_i32_0 = arith.constant 0 : i32
    %c0_i32_1 = arith.constant 0 : i32
    return %c0_i32, %c0_i32_0 : i32, i32
  }
  func.func @transform_6(%arg0: i32) -> (i32, i32) {
    %c0_i32 = arith.constant 0 : i32
    %c0_i32_0 = arith.constant 0 : i32
    %c0_i32_1 = arith.constant 0 : i32
    return %c0_i32, %c0_i32_0 : i32, i32
  }
  func.func @transform_7(%arg0: i32) -> (i32, i32) {
    %c0_i32 = arith.constant 0 : i32
    %c0_i32_0 = arith.constant 0 : i32
    %c0_i32_1 = arith.constant 0 : i32
    return %c0_i32, %c0_i32_0 : i32, i32
  }
  func.func @transform_8(%arg0: i32) -> (i32, i32) {
    %c0_i32 = arith.constant 0 : i32
    %c0_i32_0 = arith.constant 0 : i32
    %c0_i32_1 = arith.constant 0 : i32
    return %c0_i32, %c0_i32_0 : i32, i32
  }
  func.func @transform_9(%arg0: i32) -> (i32, i32) {
    %c0_i32 = arith.constant 0 : i32
    %c0_i32_0 = arith.constant 0 : i32
    return %arg0, %c0_i32 : i32, i32
  }
}

</mosaic_0001>

<llo_original>
// kernel: mlp_forward.1
$region0: #{mlp_forward.1}
  #allocation0 [shape = 'u32[]', space=smem, size = 0x4, offset = 0x4, fixed_abs, tag = 'smem constant byte address 0x4 - core index']
  #allocation1 [shape = 'u32[144,128]{1,0:T(1,128)}', space=vmem, size = 0x12000, scoped, tag = 'internal scratch']
  %s0 = inlined_call_operand.vmem [shape: f32[2,784], index: 0, kind: input, shape index: {}]
  %s1 = inlined_call_operand.hbm [shape: bf16[784,128], index: 1, kind: input, shape index: {}]
  %s2 = inlined_call_operand.vmem [shape: f32[1,128], index: 2, kind: input, shape index: {}]
  %s3 = inlined_call_operand.vmem [shape: bf16[128,128], index: 3, kind: input, shape index: {}]
  %s4 = inlined_call_operand.vmem [shape: f32[1,128], index: 4, kind: input, shape index: {}]
  %s5 = inlined_call_operand.vmem [shape: bf16[128,128], index: 5, kind: input, shape index: {}]
  %s6 = inlined_call_operand.vmem [shape: f32[1,128], index: 6, kind: input, shape index: {}]
  %s7 = inlined_call_operand.vmem [shape: bf16[128,128], index: 7, kind: input, shape index: {}]
  %s8 = inlined_call_operand.vmem [shape: f32[1,128], index: 8, kind: input, shape index: {}]
  %s9 = inlined_call_operand.hbm [shape: f32[2,10], index: 9, kind: output, shape index: {}]
  %s10 = sld [smem:[#allocation0]]
  $region50: #{mlp_forward.1} parent=0
    _
  %s12 = ssub.s32 1, %s10
  %s13 = scalar_select 0, %s12, %s10
  $region1: #{mlp_forward.1} parent=0
    #allocation2 [shape = 'u8[200704]{0}', space=vmem, size = 0x31000, scoped, tag = 'input window, operand 1, single buffered']
    #allocation3 [shape = 's32[1]{0}', space=sflag, size = 0x4, scoped, tag = 'scoped memory for mlp_forward.1']
    #allocation4 [shape = 's32[1]{0}', space=sflag, size = 0x4, scoped, tag = 'scoped memory for mlp_forward.1']
    #allocation5 [shape = 'u8[1024]{0}', space=vmem, size = 0x400, scoped, tag = 'output window, operand 0, single buffered']
    %14 = vsyncpa [#allocation3], 0
    %15 = vsyncpa [#allocation4], 0
    // Predicated region
    $region2: #{mlp_forward.1} parent=1 // pred_check
      _
    $region3: #{mlp_forward.1} parent=1 // pred_check_branch
      %17 = sbr.rel (0) target = $region5
    $region4: #{mlp_forward.1} parent=1 // pred_region
      _
    $region5: #{mlp_forward.1} parent=1 // pred_fallthru
      _
    // Predicated region
    $region6: #{mlp_forward.1} parent=1 // pred_check
      _
    $region7: #{mlp_forward.1} parent=1 // pred_check_branch
      %19 = sbr.rel (0) target = $region9
    $region8: #{mlp_forward.1} parent=1 // pred_region
      %s21 = ssub.s32 6272, 6272
      %22 = vsyncadd [#allocation3], %s21
      %s23 = sshll.u32 [#allocation2], 4
      %s24 = int_to_ptr.vmem [resolvable:$true] %s23
      %29 = dma.hbm_to_vmem [thread:$0]  %s1, 6272, %s24, [#allocation3], 64, 64, 4
    $region9: #{mlp_forward.1} parent=1 // pred_fallthru
      _
    // Predicated region
    $region10: #{mlp_forward.1} parent=1 // pred_check
      _
    $region11: #{mlp_forward.1} parent=1 // pred_check_branch
      %31 = sbr.rel (0) target = $region13
    $region12: #{mlp_forward.1} parent=1 // pred_region
      _
    $region13: #{mlp_forward.1} parent=1 // pred_fallthru
      _
    // Predicated region
    $region14: #{mlp_forward.1} parent=1 // pred_check
      _
    $region15: #{mlp_forward.1} parent=1 // pred_check_branch
      %33 = sbr.rel (0) target = $region17
    $region16: #{mlp_forward.1} parent=1 // pred_region
      _
    $region17: #{mlp_forward.1} parent=1 // pred_fallthru
      _
    // Predicated region
    $region18: #{mlp_forward.1} parent=1 // pred_check
      _
    $region19: #{mlp_forward.1} parent=1 // pred_check_branch
      %35 = sbr.rel (0) target = $region21
    $region20: #{mlp_forward.1} parent=1 // pred_region
      _
    $region21: #{mlp_forward.1} parent=1 // pred_fallthru
      _
    // Predicated region
    $region22: #{mlp_forward.1} parent=1 // pred_check
      _
    $region23: #{mlp_forward.1} parent=1 // pred_check_branch
      %37 = sbr.rel (0) target = $region25
    $region24: #{mlp_forward.1} parent=1 // pred_region
      _
    $region25: #{mlp_forward.1} parent=1 // pred_fallthru
      _
    // Predicated region
    $region26: #{mlp_forward.1} parent=1 // pred_check
      _
    $region27: #{mlp_forward.1} parent=1 // pred_check_branch
      %39 = sbr.rel (0) target = $region29
    $region28: #{mlp_forward.1} parent=1 // pred_region
      _
    $region29: #{mlp_forward.1} parent=1 // pred_fallthru
      _
    // Predicated region
    $region30: #{mlp_forward.1} parent=1 // pred_check
      _
    $region31: #{mlp_forward.1} parent=1 // pred_check_branch
      %41 = sbr.rel (0) target = $region33
    $region32: #{mlp_forward.1} parent=1 // pred_region
      _
    $region33: #{mlp_forward.1} parent=1 // pred_fallthru
      _
    // Predicated region
    $region34: #{mlp_forward.1} parent=1 // pred_check
      _
    $region35: #{mlp_forward.1} parent=1 // pred_check_branch
      %43 = sbr.rel (0) target = $region37
    $region36: #{mlp_forward.1} parent=1 // pred_region
      _
    $region37: #{mlp_forward.1} parent=1 // pred_fallthru
      _
    // Predicated region
    $region38: #{mlp_forward.1} parent=1 // pred_check
      _
    $region39: #{mlp_forward.1} parent=1 // pred_check_branch
      %45 = sbr.rel (0) target = $region41
    $region40: #{mlp_forward.1} parent=1 // pred_region
      %46 = dma.done [#allocation3], 6272
    $region41: #{mlp_forward.1} parent=1 // pred_fallthru
      _
    %v48 = vld [vmem:[%s0] sm:$0xff]
    %v49 = vld [vmem:[%s0 + $0x8] sm:$0x3f]
    %v52 = vcombine.high %v48, %v48
    %v54 = vunpack.c.l.s4 1983009808
    %v55 = vunpack.c.0.s8 %v54
    %v56 = vlaneseq
    %v57 = vshrl.u32 %v56, 7
    %v58 = vsub.s32 %v55, %v57
    %v59 = vrot.slane %v48, %v58
    %v61 = vunpack.c.l.s4 1983009808
    %v62 = vunpack.c.0.s8 %v61
    %v63 = vlaneseq
    %v64 = vshrl.u32 %v63, 7
    %v65 = vsub.s32 %v62, %v64
    %v66 = vrot.slane %v52, %v65
    %v67 = vcombine.high %v59, %v59
    %v68 = vcombine.high %v66, %v66
    %v69 = vcombine.high %v49, %v49
    %v71 = vunpack.c.l.s4 1983009808
    %v72 = vunpack.c.0.s8 %v71
    %v73 = vlaneseq
    %v74 = vshrl.u32 %v73, 7
    %v75 = vsub.s32 %v72, %v74
    %v76 = vrot.slane %v49, %v75
    %v78 = vunpack.c.l.s4 1983009808
    %v79 = vunpack.c.0.s8 %v78
    %v80 = vlaneseq
    %v81 = vshrl.u32 %v80, 7
    %v82 = vsub.s32 %v79, %v81
    %v83 = vrot.slane %v69, %v82
    %v84 = vcombine.high %v76, %v76
    %v92 = vpack.c.bf16 %v59, %v59
    %v93 = vpack.c.bf16 %v67, %v67
    %v94 = vpack.c.bf16 %v66, %v66
    %v95 = vpack.c.bf16 %v68, %v68
    %v96 = vpack.c.bf16 %v76, %v76
    %v97 = vpack.c.bf16 %v84, %v84
    %v98 = vpack.c.bf16 %v83, %v83
    %v99 = vld [vmem:[#allocation2] sm:$0xf]
    %v100 = vld [vmem:[#allocation2 + $0x4] sm:$0xf]
    %v101 = vld [vmem:[#allocation2 + $0x8] sm:$0xf]
    %v102 = vld [vmem:[#allocation2 + $0xc] sm:$0xf]
    %v103 = vld [vmem:[#allocation2 + $0x10] sm:$0xf]
    %v104 = vld [vmem:[#allocation2 + $0x14] sm:$0xf]
    %v105 = vld [vmem:[#allocation2 + $0x18] sm:$0xf]
    %v106 = vld [vmem:[#allocation2 + $0x1c] sm:$0xf]
    %v107 = vld [vmem:[#allocation2 + $0x20] sm:$0xf]
    %v108 = vld [vmem:[#allocation2 + $0x24] sm:$0xf]
    %v109 = vld [vmem:[#allocation2 + $0x28] sm:$0xf]
    %v110 = vld [vmem:[#allocation2 + $0x2c] sm:$0xf]
    %v111 = vld [vmem:[#allocation2 + $0x30] sm:$0xf]
    %v112 = vld [vmem:[#allocation2 + $0x34] sm:$0xf]
    %v113 = vld [vmem:[#allocation2 + $0x38] sm:$0xf]
    %v114 = vld [vmem:[#allocation2 + $0x3c] sm:$0xf]
    %v115 = vld [vmem:[#allocation2 + $0x40] sm:$0xf]
    %v116 = vld [vmem:[#allocation2 + $0x44] sm:$0xf]
    %v117 = vld [vmem:[#allocation2 + $0x48] sm:$0xf]
    %v118 = vld [vmem:[#allocation2 + $0x4c] sm:$0xf]
    %v119 = vld [vmem:[#allocation2 + $0x50] sm:$0xf]
    %v120 = vld [vmem:[#allocation2 + $0x54] sm:$0xf]
    %v121 = vld [vmem:[#allocation2 + $0x58] sm:$0xf]
    %v122 = vld [vmem:[#allocation2 + $0x5c] sm:$0xf]
    %v123 = vld [vmem:[#allocation2 + $0x60] sm:$0xf]
    %v124 = vld [vmem:[#allocation2 + $0x64] sm:$0xf]
    %v125 = vld [vmem:[#allocation2 + $0x68] sm:$0xf]
    %v126 = vld [vmem:[#allocation2 + $0x6c] sm:$0xf]
    %v127 = vld [vmem:[#allocation2 + $0x70] sm:$0xf]
    %v128 = vld [vmem:[#allocation2 + $0x74] sm:$0xf]
    %v129 = vld [vmem:[#allocation2 + $0x78] sm:$0xf]
    %v130 = vld [vmem:[#allocation2 + $0x7c] sm:$0xf]
    %v131 = vld [vmem:[#allocation2 + $0x80] sm:$0xf]
    %v132 = vld [vmem:[#allocation2 + $0x84] sm:$0xf]
    %v133 = vld [vmem:[#allocation2 + $0x88] sm:$0xf]
    %v134 = vld [vmem:[#allocation2 + $0x8c] sm:$0xf]
    %v135 = vld [vmem:[#allocation2 + $0x90] sm:$0xf]
    %v136 = vld [vmem:[#allocation2 + $0x94] sm:$0xf]
    %v137 = vld [vmem:[#allocation2 + $0x98] sm:$0xf]
    %v138 = vld [vmem:[#allocation2 + $0x9c] sm:$0xf]
    %v139 = vld [vmem:[#allocation2 + $0xa0] sm:$0xf]
    %v140 = vld [vmem:[#allocation2 + $0xa4] sm:$0xf]
    %v141 = vld [vmem:[#allocation2 + $0xa8] sm:$0xf]
    %v142 = vld [vmem:[#allocation2 + $0xac] sm:$0xf]
    %v143 = vld [vmem:[#allocation2 + $0xb0] sm:$0xf]
    %v144 = vld [vmem:[#allocation2 + $0xb4] sm:$0xf]
    %v145 = vld [vmem:[#allocation2 + $0xb8] sm:$0xf]
    %v146 = vld [vmem:[#allocation2 + $0xbc] sm:$0xf]
    %v147 = vld [vmem:[#allocation2 + $0xc0] sm:$0xf]
    %v148 = vld [vmem:[#allocation2 + $0xc4] sm:$0xf]
    %v149 = vld [vmem:[#allocation2 + $0xc8] sm:$0xf]
    %v150 = vld [vmem:[#allocation2 + $0xcc] sm:$0xf]
    %v151 = vld [vmem:[#allocation2 + $0xd0] sm:$0xf]
    %v152 = vld [vmem:[#allocation2 + $0xd4] sm:$0xf]
    %v153 = vld [vmem:[#allocation2 + $0xd8] sm:$0xf]
    %v154 = vld [vmem:[#allocation2 + $0xdc] sm:$0xf]
    %v155 = vld [vmem:[#allocation2 + $0xe0] sm:$0xf]
    %v156 = vld [vmem:[#allocation2 + $0xe4] sm:$0xf]
    %v157 = vld [vmem:[#allocation2 + $0xe8] sm:$0xf]
    %v158 = vld [vmem:[#allocation2 + $0xec] sm:$0xf]
    %v159 = vld [vmem:[#allocation2 + $0xf0] sm:$0xf]
    %v160 = vld [vmem:[#allocation2 + $0xf4] sm:$0xf]
    %v161 = vld [vmem:[#allocation2 + $0xf8] sm:$0xf]
    %v162 = vld [vmem:[#allocation2 + $0xfc] sm:$0xf]
    %v163 = vld [vmem:[#allocation2 + $0x100] sm:$0xf]
    %v164 = vld [vmem:[#allocation2 + $0x104] sm:$0xf]
    %v165 = vld [vmem:[#allocation2 + $0x108] sm:$0xf]
    %v166 = vld [vmem:[#allocation2 + $0x10c] sm:$0xf]
    %v167 = vld [vmem:[#allocation2 + $0x110] sm:$0xf]
    %v168 = vld [vmem:[#allocation2 + $0x114] sm:$0xf]
    %v169 = vld [vmem:[#allocation2 + $0x118] sm:$0xf]
    %v170 = vld [vmem:[#allocation2 + $0x11c] sm:$0xf]
    %v171 = vld [vmem:[#allocation2 + $0x120] sm:$0xf]
    %v172 = vld [vmem:[#allocation2 + $0x124] sm:$0xf]
    %v173 = vld [vmem:[#allocation2 + $0x128] sm:$0xf]
    %v174 = vld [vmem:[#allocation2 + $0x12c] sm:$0xf]
    %v175 = vld [vmem:[#allocation2 + $0x130] sm:$0xf]
    %v176 = vld [vmem:[#allocation2 + $0x134] sm:$0xf]
    %v177 = vld [vmem:[#allocation2 + $0x138] sm:$0xf]
    %v178 = vld [vmem:[#allocation2 + $0x13c] sm:$0xf]
    %v179 = vld [vmem:[#allocation2 + $0x140] sm:$0xf]
    %v180 = vld [vmem:[#allocation2 + $0x144] sm:$0xf]
    %v181 = vld [vmem:[#allocation2 + $0x148] sm:$0xf]
    %v182 = vld [vmem:[#allocation2 + $0x14c] sm:$0xf]
    %v183 = vld [vmem:[#allocation2 + $0x150] sm:$0xf]
    %v184 = vld [vmem:[#allocation2 + $0x154] sm:$0xf]
    %v185 = vld [vmem:[#allocation2 + $0x158] sm:$0xf]
    %v186 = vld [vmem:[#allocation2 + $0x15c] sm:$0xf]
    %v187 = vld [vmem:[#allocation2 + $0x160] sm:$0xf]
    %v188 = vld [vmem:[#allocation2 + $0x164] sm:$0xf]
    %v189 = vld [vmem:[#allocation2 + $0x168] sm:$0xf]
    %v190 = vld [vmem:[#allocation2 + $0x16c] sm:$0xf]
    %v191 = vld [vmem:[#allocation2 + $0x170] sm:$0xf]
    %v192 = vld [vmem:[#allocation2 + $0x174] sm:$0xf]
    %v193 = vld [vmem:[#allocation2 + $0x178] sm:$0xf]
    %v194 = vld [vmem:[#allocation2 + $0x17c] sm:$0xf]
    %v195 = vld [vmem:[#allocation2 + $0x180] sm:$0xf]
    %v196 = vld [vmem:[#allocation2 + $0x184] sm:$0xf]
    %v197 = vld [vmem:[%s2] sm:$0x1]
    %v199 = vlaneseq
    %v200 = vshrl.u32 %v199, 7
    %v201 = vsub.s32 0, %v200
    %v202 = vrot.slane %v197, %v201
    %v302 = vunpack.c.l.b16 %v99
    %v303 = vunpack.c.l.b16 %v100
    %v304 = vunpack.c.l.b16 %v101
    %v305 = vunpack.c.l.b16 %v102
    %v306 = vunpack.c.l.b16 %v103
    %v307 = vunpack.c.l.b16 %v104
    %v308 = vunpack.c.l.b16 %v105
    %v309 = vunpack.c.l.b16 %v106
    %v310 = vunpack.c.l.b16 %v107
    %v311 = vunpack.c.l.b16 %v108
    %v312 = vunpack.c.l.b16 %v109
    %v313 = vunpack.c.l.b16 %v110
    %v314 = vunpack.c.l.b16 %v111
    %v315 = vunpack.c.l.b16 %v112
    %v316 = vunpack.c.l.b16 %v113
    %v317 = vunpack.c.l.b16 %v114
    %v318 = vunpack.c.l.b16 %v115
    %v319 = vunpack.c.l.b16 %v116
    %v320 = vunpack.c.l.b16 %v117
    %v321 = vunpack.c.l.b16 %v118
    %v322 = vunpack.c.l.b16 %v119
    %v323 = vunpack.c.l.b16 %v120
    %v324 = vunpack.c.l.b16 %v121
    %v325 = vunpack.c.l.b16 %v122
    %v326 = vunpack.c.l.b16 %v123
    %v327 = vunpack.c.l.b16 %v124
    %v328 = vunpack.c.l.b16 %v125
    %v329 = vunpack.c.l.b16 %v126
    %v330 = vunpack.c.l.b16 %v127
    %v331 = vunpack.c.l.b16 %v128
    %v332 = vunpack.c.l.b16 %v129
    %v333 = vunpack.c.l.b16 %v130
    %v334 = vunpack.c.l.b16 %v131
    %v335 = vunpack.c.l.b16 %v132
    %v336 = vunpack.c.l.b16 %v133
    %v337 = vunpack.c.l.b16 %v134
    %v338 = vunpack.c.l.b16 %v135
    %v339 = vunpack.c.l.b16 %v136
    %v340 = vunpack.c.l.b16 %v137
    %v341 = vunpack.c.l.b16 %v138
    %v342 = vunpack.c.l.b16 %v139
    %v343 = vunpack.c.l.b16 %v140
    %v344 = vunpack.c.l.b16 %v141
    %v345 = vunpack.c.l.b16 %v142
    %v346 = vunpack.c.l.b16 %v143
    %v347 = vunpack.c.l.b16 %v144
    %v348 = vunpack.c.l.b16 %v145
    %v349 = vunpack.c.l.b16 %v146
    %v350 = vunpack.c.l.b16 %v147
    %v351 = vunpack.c.l.b16 %v148
    %v352 = vunpack.c.l.b16 %v149
    %v353 = vunpack.c.l.b16 %v150
    %v354 = vunpack.c.l.b16 %v151
    %v355 = vunpack.c.l.b16 %v152
    %v356 = vunpack.c.l.b16 %v153
    %v357 = vunpack.c.l.b16 %v154
    %v358 = vunpack.c.l.b16 %v155
    %v359 = vunpack.c.l.b16 %v156
    %v360 = vunpack.c.l.b16 %v157
    %v361 = vunpack.c.l.b16 %v158
    %v362 = vunpack.c.l.b16 %v159
    %v363 = vunpack.c.l.b16 %v160
    %v364 = vunpack.c.l.b16 %v161
    %v365 = vunpack.c.l.b16 %v162
    %v366 = vunpack.c.l.b16 %v163
    %v367 = vunpack.c.l.b16 %v164
    %v368 = vunpack.c.l.b16 %v165
    %v369 = vunpack.c.l.b16 %v166
    %v370 = vunpack.c.l.b16 %v167
    %v371 = vunpack.c.l.b16 %v168
    %v372 = vunpack.c.l.b16 %v169
    %v373 = vunpack.c.l.b16 %v170
    %v374 = vunpack.c.l.b16 %v171
    %v375 = vunpack.c.l.b16 %v172
    %v376 = vunpack.c.l.b16 %v173
    %v377 = vunpack.c.l.b16 %v174
    %v378 = vunpack.c.l.b16 %v175
    %v379 = vunpack.c.l.b16 %v176
    %v380 = vunpack.c.l.b16 %v177
    %v381 = vunpack.c.l.b16 %v178
    %v382 = vunpack.c.l.b16 %v179
    %v383 = vunpack.c.l.b16 %v180
    %v384 = vunpack.c.l.b16 %v181
    %v385 = vunpack.c.l.b16 %v182
    %v386 = vunpack.c.l.b16 %v183
    %v387 = vunpack.c.l.b16 %v184
    %v388 = vunpack.c.l.b16 %v185
    %v389 = vunpack.c.l.b16 %v186
    %v390 = vunpack.c.l.b16 %v187
    %v391 = vunpack.c.l.b16 %v188
    %v392 = vunpack.c.l.b16 %v189
    %v393 = vunpack.c.l.b16 %v190
    %v394 = vunpack.c.l.b16 %v191
    %v395 = vunpack.c.l.b16 %v192
    %v396 = vunpack.c.l.b16 %v193
    %v397 = vunpack.c.l.b16 %v194
    %v398 = vunpack.c.l.b16 %v195
    %v399 = vunpack.c.l.b16 %v196
    %v400 = vpack.c.b16 %v303, %v302
    %v401 = vpack.c.b16 %v305, %v304
    %v402 = vpack.c.b16 %v307, %v306
    %v403 = vpack.c.b16 %v309, %v308
    %v404 = vpack.c.b16 %v311, %v310
    %v405 = vpack.c.b16 %v313, %v312
    %v406 = vpack.c.b16 %v315, %v314
    %v407 = vpack.c.b16 %v317, %v316
    %v408 = vpack.c.b16 %v319, %v318
    %v409 = vpack.c.b16 %v321, %v320
    %v410 = vpack.c.b16 %v323, %v322
    %v411 = vpack.c.b16 %v325, %v324
    %v412 = vpack.c.b16 %v327, %v326
    %v413 = vpack.c.b16 %v329, %v328
    %v414 = vpack.c.b16 %v331, %v330
    %v415 = vpack.c.b16 %v333, %v332
    %v416 = vpack.c.b16 %v335, %v334
    %v417 = vpack.c.b16 %v337, %v336
    %v418 = vpack.c.b16 %v339, %v338
    %v419 = vpack.c.b16 %v341, %v340
    %v420 = vpack.c.b16 %v343, %v342
    %v421 = vpack.c.b16 %v345, %v344
    %v422 = vpack.c.b16 %v347, %v346
    %v423 = vpack.c.b16 %v349, %v348
    %v424 = vpack.c.b16 %v351, %v350
    %v425 = vpack.c.b16 %v353, %v352
    %v426 = vpack.c.b16 %v355, %v354
    %v427 = vpack.c.b16 %v357, %v356
    %v428 = vpack.c.b16 %v359, %v358
    %v429 = vpack.c.b16 %v361, %v360
    %v430 = vpack.c.b16 %v363, %v362
    %v431 = vpack.c.b16 %v365, %v364
    %v432 = vpack.c.b16 %v367, %v366
    %v433 = vpack.c.b16 %v369, %v368
    %v434 = vpack.c.b16 %v371, %v370
    %v435 = vpack.c.b16 %v373, %v372
    %v436 = vpack.c.b16 %v375, %v374
    %v437 = vpack.c.b16 %v377, %v376
    %v438 = vpack.c.b16 %v379, %v378
    %v439 = vpack.c.b16 %v381, %v380
    %v440 = vpack.c.b16 %v383, %v382
    %v441 = vpack.c.b16 %v385, %v384
    %v442 = vpack.c.b16 %v387, %v386
    %v443 = vpack.c.b16 %v389, %v388
    %v444 = vpack.c.b16 %v391, %v390
    %v445 = vpack.c.b16 %v393, %v392
    %v446 = vpack.c.b16 %v395, %v394
    %v447 = vpack.c.b16 %v397, %v396
    %v448 = vpack.c.b16 %v399, %v398
    %vm498 = vcmask 130048
    %v500 = vsel %vm498, %v98, 0
    %502 = vmatprep.subr.bf16.mxu0 0
    %503 = vmatpush1.bf16.msra.mxu0 %v400
    %504 = vmatprep.subr.bf16.mxu0 0
    %505 = vmatpush1.bf16.msra.mxu0 %v401
    %506 = vmatprep.subr.bf16.mxu0 0
    %507 = vmatpush1.bf16.msra.mxu0 %v402
    %508 = vmatprep.subr.bf16.mxu0 0
    %509 = vmatpush1.bf16.msra.mxu0 %v403
    %510 = vmatprep.subr.bf16.mxu0 0
    %511 = vmatpush1.bf16.msra.mxu0 %v404
    %512 = vmatprep.subr.bf16.mxu0 0
    %513 = vmatpush1.bf16.msra.mxu0 %v405
    %514 = vmatprep.subr.bf16.mxu0 0
    %515 = vmatpush1.bf16.msra.mxu0 %v406
    %516 = vmatprep.subr.bf16.mxu0 0
    %517 = vmatpush1.bf16.msra.mxu0 %v407
    %518 = vmatprep.subr.bf16.mxu0 0
    %519 = vmatpush1.bf16.msra.mxu0 %v408
    %520 = vmatprep.subr.bf16.mxu0 0
    %521 = vmatpush1.bf16.msra.mxu0 %v409
    %522 = vmatprep.subr.bf16.mxu0 0
    %523 = vmatpush1.bf16.msra.mxu0 %v410
    %524 = vmatprep.subr.bf16.mxu0 0
    %525 = vmatpush1.bf16.msra.mxu0 %v411
    %526 = vmatprep.subr.bf16.mxu0 0
    %527 = vmatpush1.bf16.msra.mxu0 %v412
    %528 = vmatprep.subr.bf16.mxu0 0
    %529 = vmatpush1.bf16.msra.mxu0 %v413
    %530 = vmatprep.subr.bf16.mxu0 0
    %531 = vmatpush1.bf16.msra.mxu0 %v414
    %532 = vmatprep.subr.bf16.mxu0 0
    %533 = vmatpush1.bf16.msra.mxu0 %v415
    %534 = vmatprep.mubr.bf16.mxu0 %v93
    %535 = vmatmul.mubr.bf16.gmra.mrb[0].mxu0 %v92
    %v536 = vpop.f32.mrb[0].mxu0
    %v537 = vadd.f32 %v202, %v536
    %v538 = vpop.f32.mrb[0].mxu0
    %v539 = vpop.f32.mrb[0].mxu0
    %v540 = vpop.f32.mrb[0].mxu0
    %541 = vdwg.mxu0
    %542 = vmatprep.subr.bf16.mxu0 0
    %543 = vmatpush1.bf16.msra.mxu0 %v416
    %544 = vmatprep.subr.bf16.mxu0 0
    %545 = vmatpush1.bf16.msra.mxu0 %v417
    %546 = vmatprep.subr.bf16.mxu0 0
    %547 = vmatpush1.bf16.msra.mxu0 %v418
    %548 = vmatprep.subr.bf16.mxu0 0
    %549 = vmatpush1.bf16.msra.mxu0 %v419
    %550 = vmatprep.subr.bf16.mxu0 0
    %551 = vmatpush1.bf16.msra.mxu0 %v420
    %552 = vmatprep.subr.bf16.mxu0 0
    %553 = vmatpush1.bf16.msra.mxu0 %v421
    %554 = vmatprep.subr.bf16.mxu0 0
    %555 = vmatpush1.bf16.msra.mxu0 %v422
    %556 = vmatprep.subr.bf16.mxu0 0
    %557 = vmatpush1.bf16.msra.mxu0 %v423
    %558 = vmatprep.subr.bf16.mxu0 0
    %559 = vmatpush1.bf16.msra.mxu0 %v424
    %560 = vmatprep.subr.bf16.mxu0 0
    %561 = vmatpush1.bf16.msra.mxu0 %v425
    %562 = vmatprep.subr.bf16.mxu0 0
    %563 = vmatpush1.bf16.msra.mxu0 %v426
    %564 = vmatprep.subr.bf16.mxu0 0
    %565 = vmatpush1.bf16.msra.mxu0 %v427
    %566 = vmatprep.subr.bf16.mxu0 0
    %567 = vmatpush1.bf16.msra.mxu0 %v428
    %568 = vmatprep.subr.bf16.mxu0 0
    %569 = vmatpush1.bf16.msra.mxu0 %v429
    %570 = vmatprep.subr.bf16.mxu0 0
    %571 = vmatpush1.bf16.msra.mxu0 %v430
    %572 = vmatprep.subr.bf16.mxu0 0
    %573 = vmatpush1.bf16.msra.mxu0 %v431
    %574 = vmatprep.mubr.bf16.mxu0 %v95
    %575 = vmatmul.mubr.bf16.gmra.mrb[0].mxu0 %v94
    %v576 = vpop.f32.mrb[0].mxu0
    %v577 = vadd.f32 %v537, %v576
    %v578 = vpop.f32.mrb[0].mxu0
    %v579 = vpop.f32.mrb[0].mxu0
    %v580 = vpop.f32.mrb[0].mxu0
    %581 = vdwg.mxu0
    %582 = vmatprep.subr.bf16.mxu0 0
    %583 = vmatpush1.bf16.msra.mxu0 %v432
    %584 = vmatprep.subr.bf16.mxu0 0
    %585 = vmatpush1.bf16.msra.mxu0 %v433
    %586 = vmatprep.subr.bf16.mxu0 0
    %587 = vmatpush1.bf16.msra.mxu0 %v434
    %588 = vmatprep.subr.bf16.mxu0 0
    %589 = vmatpush1.bf16.msra.mxu0 %v435
    %590 = vmatprep.subr.bf16.mxu0 0
    %591 = vmatpush1.bf16.msra.mxu0 %v436
    %592 = vmatprep.subr.bf16.mxu0 0
    %593 = vmatpush1.bf16.msra.mxu0 %v437
    %594 = vmatprep.subr.bf16.mxu0 0
    %595 = vmatpush1.bf16.msra.mxu0 %v438
    %596 = vmatprep.subr.bf16.mxu0 0
    %597 = vmatpush1.bf16.msra.mxu0 %v439
    %598 = vmatprep.subr.bf16.mxu0 0
    %599 = vmatpush1.bf16.msra.mxu0 %v440
    %600 = vmatprep.subr.bf16.mxu0 0
    %601 = vmatpush1.bf16.msra.mxu0 %v441
    %602 = vmatprep.subr.bf16.mxu0 0
    %603 = vmatpush1.bf16.msra.mxu0 %v442
    %604 = vmatprep.subr.bf16.mxu0 0
    %605 = vmatpush1.bf16.msra.mxu0 %v443
    %606 = vmatprep.subr.bf16.mxu0 0
    %607 = vmatpush1.bf16.msra.mxu0 %v444
    %608 = vmatprep.subr.bf16.mxu0 0
    %609 = vmatpush1.bf16.msra.mxu0 %v445
    %610 = vmatprep.subr.bf16.mxu0 0
    %611 = vmatpush1.bf16.msra.mxu0 %v446
    %612 = vmatprep.subr.bf16.mxu0 0
    %613 = vmatpush1.bf16.msra.mxu0 %v447
    %614 = vmatprep.mubr.bf16.mxu0 %v97
    %615 = vmatmul.mubr.bf16.gmra.mrb[0].mxu0 %v96
    %v616 = vpop.f32.mrb[0].mxu0
    %v617 = vadd.f32 %v577, %v616
    %v618 = vpop.f32.mrb[0].mxu0
    %v619 = vpop.f32.mrb[0].mxu0
    %v620 = vpop.f32.mrb[0].mxu0
    %621 = vdwg.mxu0
    %622 = vmatprep.subr.bf16.mxu0 0
    %623 = vmatpush1.bf16.msra.mxu0 %v448
    %624 = vmatprep.subr.bf16.mxu0 0
    %625 = vmatpush1.bf16.msra.mxu0 0
    %626 = vmatprep.subr.bf16.mxu0 0
    %627 = vmatpush1.bf16.msra.mxu0 0
    %628 = vmatprep.subr.bf16.mxu0 0
    %629 = vmatpush1.bf16.msra.mxu0 0
    %630 = vmatprep.subr.bf16.mxu0 0
    %631 = vmatpush1.bf16.msra.mxu0 0
    %632 = vmatprep.subr.bf16.mxu0 0
    %633 = vmatpush1.bf16.msra.mxu0 0
    %634 = vmatprep.subr.bf16.mxu0 0
    %635 = vmatpush1.bf16.msra.mxu0 0
    %636 = vmatprep.subr.bf16.mxu0 0
    %637 = vmatpush1.bf16.msra.mxu0 0
    %638 = vmatprep.subr.bf16.mxu0 0
    %639 = vmatpush1.bf16.msra.mxu0 0
    %640 = vmatprep.subr.bf16.mxu0 0
    %641 = vmatpush1.bf16.msra.mxu0 0
    %642 = vmatprep.subr.bf16.mxu0 0
    %643 = vmatpush1.bf16.msra.mxu0 0
    %644 = vmatprep.subr.bf16.mxu0 0
    %645 = vmatpush1.bf16.msra.mxu0 0
    %646 = vmatprep.subr.bf16.mxu0 0
    %647 = vmatpush1.bf16.msra.mxu0 0
    %648 = vmatprep.subr.bf16.mxu0 0
    %649 = vmatpush1.bf16.msra.mxu0 0
    %650 = vmatprep.subr.bf16.mxu0 0
    %651 = vmatpush1.bf16.msra.mxu0 0
    %652 = vmatprep.subr.bf16.mxu0 0
    %653 = vmatpush1.bf16.msra.mxu0 0
    %654 = vmatprep.mubr.bf16.mxu0 0
    %655 = vmatmul.mubr.bf16.gmra.mrb[0].mxu0 %v500
    %v656 = vpop.f32.mrb[0].mxu0
    %v657 = vadd.f32 %v617, %v656
    %v658 = vpop.f32.mrb[0].mxu0
    %v659 = vpop.f32.mrb[0].mxu0
    %v660 = vpop.f32.mrb[0].mxu0
    %661 = vdwg.mxu0
    %v662 = vmax.f32 %v657, 0.0
    %v663 = vpack.c.bf16 %v662, %v662
    %v664 = vld [vmem:[%s3] sm:$0xf]
    %v665 = vld [vmem:[%s3 + $0x4] sm:$0xf]
    %v666 = vld [vmem:[%s3 + $0x8] sm:$0xf]
    %v667 = vld [vmem:[%s3 + $0xc] sm:$0xf]
    %v668 = vld [vmem:[%s3 + $0x10] sm:$0xf]
    %v669 = vld [vmem:[%s3 + $0x14] sm:$0xf]
    %v670 = vld [vmem:[%s3 + $0x18] sm:$0xf]
    %v671 = vld [vmem:[%s3 + $0x1c] sm:$0xf]
    %v672 = vld [vmem:[%s3 + $0x20] sm:$0xf]
    %v673 = vld [vmem:[%s3 + $0x24] sm:$0xf]
    %v674 = vld [vmem:[%s3 + $0x28] sm:$0xf]
    %v675 = vld [vmem:[%s3 + $0x2c] sm:$0xf]
    %v676 = vld [vmem:[%s3 + $0x30] sm:$0xf]
    %v677 = vld [vmem:[%s3 + $0x34] sm:$0xf]
    %v678 = vld [vmem:[%s3 + $0x38] sm:$0xf]
    %v679 = vld [vmem:[%s3 + $0x3c] sm:$0xf]
    %v680 = vld [vmem:[%s4] sm:$0x1]
    %v682 = vlaneseq
    %v683 = vshrl.u32 %v682, 7
    %v684 = vsub.s32 0, %v683
    %v685 = vrot.slane %v680, %v684
    %v703 = vunpack.c.l.b16 %v664
    %v704 = vunpack.c.l.b16 %v665
    %v705 = vunpack.c.l.b16 %v666
    %v706 = vunpack.c.l.b16 %v667
    %v707 = vunpack.c.l.b16 %v668
    %v708 = vunpack.c.l.b16 %v669
    %v709 = vunpack.c.l.b16 %v670
    %v710 = vunpack.c.l.b16 %v671
    %v711 = vunpack.c.l.b16 %v672
    %v712 = vunpack.c.l.b16 %v673
    %v713 = vunpack.c.l.b16 %v674
    %v714 = vunpack.c.l.b16 %v675
    %v715 = vunpack.c.l.b16 %v676
    %v716 = vunpack.c.l.b16 %v677
    %v717 = vunpack.c.l.b16 %v678
    %v718 = vunpack.c.l.b16 %v679
    %v719 = vpack.c.b16 %v704, %v703
    %v720 = vpack.c.b16 %v706, %v705
    %v721 = vpack.c.b16 %v708, %v707
    %v722 = vpack.c.b16 %v710, %v709
    %v723 = vpack.c.b16 %v712, %v711
    %v724 = vpack.c.b16 %v714, %v713
    %v725 = vpack.c.b16 %v716, %v715
    %v726 = vpack.c.b16 %v718, %v717
    %735 = vmatprep.subr.bf16.mxu0 0
    %736 = vmatpush1.bf16.msra.mxu0 %v719
    %737 = vmatprep.subr.bf16.mxu0 0
    %738 = vmatpush1.bf16.msra.mxu0 %v720
    %739 = vmatprep.subr.bf16.mxu0 0
    %740 = vmatpush1.bf16.msra.mxu0 %v721
    %741 = vmatprep.subr.bf16.mxu0 0
    %742 = vmatpush1.bf16.msra.mxu0 %v722
    %743 = vmatprep.subr.bf16.mxu0 0
    %744 = vmatpush1.bf16.msra.mxu0 %v723
    %745 = vmatprep.subr.bf16.mxu0 0
    %746 = vmatpush1.bf16.msra.mxu0 %v724
    %747 = vmatprep.subr.bf16.mxu0 0
    %748 = vmatpush1.bf16.msra.mxu0 %v725
    %749 = vmatprep.subr.bf16.mxu0 0
    %750 = vmatpush1.bf16.msra.mxu0 %v726
    %751 = vmatprep.subr.bf16.mxu0 0
    %752 = vmatpush1.bf16.msra.mxu0 0
    %753 = vmatprep.subr.bf16.mxu0 0
    %754 = vmatpush1.bf16.msra.mxu0 0
    %755 = vmatprep.subr.bf16.mxu0 0
    %756 = vmatpush1.bf16.msra.mxu0 0
    %757 = vmatprep.subr.bf16.mxu0 0
    %758 = vmatpush1.bf16.msra.mxu0 0
    %759 = vmatprep.subr.bf16.mxu0 0
    %760 = vmatpush1.bf16.msra.mxu0 0
    %761 = vmatprep.subr.bf16.mxu0 0
    %762 = vmatpush1.bf16.msra.mxu0 0
    %763 = vmatprep.subr.bf16.mxu0 0
    %764 = vmatpush1.bf16.msra.mxu0 0
    %765 = vmatprep.subr.bf16.mxu0 0
    %766 = vmatpush1.bf16.msra.mxu0 0
    %767 = vmatprep.mubr.bf16.mxu0 0
    %768 = vmatmul.mubr.bf16.gmra.mrb[0].mxu0 %v663
    %v769 = vpop.f32.mrb[0].mxu0
    %v770 = vadd.f32 %v685, %v769
    %v771 = vpop.f32.mrb[0].mxu0
    %v772 = vpop.f32.mrb[0].mxu0
    %v773 = vpop.f32.mrb[0].mxu0
    %774 = vdwg.mxu0
    %v775 = vmax.f32 %v770, 0.0
    %v776 = vpack.c.bf16 %v775, %v775
    %v777 = vld [vmem:[%s5] sm:$0xf]
    %v778 = vld [vmem:[%s5 + $0x4] sm:$0xf]
    %v779 = vld [vmem:[%s5 + $0x8] sm:$0xf]
    %v780 = vld [vmem:[%s5 + $0xc] sm:$0xf]
    %v781 = vld [vmem:[%s5 + $0x10] sm:$0xf]
    %v782 = vld [vmem:[%s5 + $0x14] sm:$0xf]
    %v783 = vld [vmem:[%s5 + $0x18] sm:$0xf]
    %v784 = vld [vmem:[%s5 + $0x1c] sm:$0xf]
    %v785 = vld [vmem:[%s5 + $0x20] sm:$0xf]
    %v786 = vld [vmem:[%s5 + $0x24] sm:$0xf]
    %v787 = vld [vmem:[%s5 + $0x28] sm:$0xf]
    %v788 = vld [vmem:[%s5 + $0x2c] sm:$0xf]
    %v789 = vld [vmem:[%s5 + $0x30] sm:$0xf]
    %v790 = vld [vmem:[%s5 + $0x34] sm:$0xf]
    %v791 = vld [vmem:[%s5 + $0x38] sm:$0xf]
    %v792 = vld [vmem:[%s5 + $0x3c] sm:$0xf]
    %v793 = vld [vmem:[%s6] sm:$0x1]
    %v795 = vlaneseq
    %v796 = vshrl.u32 %v795, 7
    %v797 = vsub.s32 0, %v796
    %v798 = vrot.slane %v793, %v797
    %v816 = vunpack.c.l.b16 %v777
    %v817 = vunpack.c.l.b16 %v778
    %v818 = vunpack.c.l.b16 %v779
    %v819 = vunpack.c.l.b16 %v780
    %v820 = vunpack.c.l.b16 %v781
    %v821 = vunpack.c.l.b16 %v782
    %v822 = vunpack.c.l.b16 %v783
    %v823 = vunpack.c.l.b16 %v784
    %v824 = vunpack.c.l.b16 %v785
    %v825 = vunpack.c.l.b16 %v786
    %v826 = vunpack.c.l.b16 %v787
    %v827 = vunpack.c.l.b16 %v788
    %v828 = vunpack.c.l.b16 %v789
    %v829 = vunpack.c.l.b16 %v790
    %v830 = vunpack.c.l.b16 %v791
    %v831 = vunpack.c.l.b16 %v792
    %v832 = vpack.c.b16 %v817, %v816
    %v833 = vpack.c.b16 %v819, %v818
    %v834 = vpack.c.b16 %v821, %v820
    %v835 = vpack.c.b16 %v823, %v822
    %v836 = vpack.c.b16 %v825, %v824
    %v837 = vpack.c.b16 %v827, %v826
    %v838 = vpack.c.b16 %v829, %v828
    %v839 = vpack.c.b16 %v831, %v830
    %848 = vmatprep.subr.bf16.mxu0 0
    %849 = vmatpush1.bf16.msra.mxu0 %v832
    %850 = vmatprep.subr.bf16.mxu0 0
    %851 = vmatpush1.bf16.msra.mxu0 %v833
    %852 = vmatprep.subr.bf16.mxu0 0
    %853 = vmatpush1.bf16.msra.mxu0 %v834
    %854 = vmatprep.subr.bf16.mxu0 0
    %855 = vmatpush1.bf16.msra.mxu0 %v835
    %856 = vmatprep.subr.bf16.mxu0 0
    %857 = vmatpush1.bf16.msra.mxu0 %v836
    %858 = vmatprep.subr.bf16.mxu0 0
    %859 = vmatpush1.bf16.msra.mxu0 %v837
    %860 = vmatprep.subr.bf16.mxu0 0
    %861 = vmatpush1.bf16.msra.mxu0 %v838
    %862 = vmatprep.subr.bf16.mxu0 0
    %863 = vmatpush1.bf16.msra.mxu0 %v839
    %864 = vmatprep.subr.bf16.mxu0 0
    %865 = vmatpush1.bf16.msra.mxu0 0
    %866 = vmatprep.subr.bf16.mxu0 0
    %867 = vmatpush1.bf16.msra.mxu0 0
    %868 = vmatprep.subr.bf16.mxu0 0
    %869 = vmatpush1.bf16.msra.mxu0 0
    %870 = vmatprep.subr.bf16.mxu0 0
    %871 = vmatpush1.bf16.msra.mxu0 0
    %872 = vmatprep.subr.bf16.mxu0 0
    %873 = vmatpush1.bf16.msra.mxu0 0
    %874 = vmatprep.subr.bf16.mxu0 0
    %875 = vmatpush1.bf16.msra.mxu0 0
    %876 = vmatprep.subr.bf16.mxu0 0
    %877 = vmatpush1.bf16.msra.mxu0 0
    %878 = vmatprep.subr.bf16.mxu0 0
    %879 = vmatpush1.bf16.msra.mxu0 0
    %880 = vmatprep.mubr.bf16.mxu0 0
    %881 = vmatmul.mubr.bf16.gmra.mrb[0].mxu0 %v776
    %v882 = vpop.f32.mrb[0].mxu0
    %v883 = vadd.f32 %v798, %v882
    %v884 = vpop.f32.mrb[0].mxu0
    %v885 = vpop.f32.mrb[0].mxu0
    %v886 = vpop.f32.mrb[0].mxu0
    %887 = vdwg.mxu0
    %v888 = vmax.f32 %v883, 0.0
    %v889 = vpack.c.bf16 %v888, %v888
    %v890 = vld [vmem:[%s7] sm:$0xf]
    %v891 = vld [vmem:[%s7 + $0x4] sm:$0xf]
    %v892 = vld [vmem:[%s7 + $0x8] sm:$0xf]
    %v893 = vld [vmem:[%s7 + $0xc] sm:$0xf]
    %v894 = vld [vmem:[%s7 + $0x10] sm:$0xf]
    %v895 = vld [vmem:[%s7 + $0x14] sm:$0xf]
    %v896 = vld [vmem:[%s7 + $0x18] sm:$0xf]
    %v897 = vld [vmem:[%s7 + $0x1c] sm:$0xf]
    %v898 = vld [vmem:[%s7 + $0x20] sm:$0xf]
    %v899 = vld [vmem:[%s7 + $0x24] sm:$0xf]
    %v900 = vld [vmem:[%s7 + $0x28] sm:$0xf]
    %v901 = vld [vmem:[%s7 + $0x2c] sm:$0xf]
    %v902 = vld [vmem:[%s7 + $0x30] sm:$0xf]
    %v903 = vld [vmem:[%s7 + $0x34] sm:$0xf]
    %v904 = vld [vmem:[%s7 + $0x38] sm:$0xf]
    %v905 = vld [vmem:[%s7 + $0x3c] sm:$0xf]
    %v922 = vunpack.c.l.b16 %v890
    %v923 = vunpack.c.l.b16 %v891
    %v924 = vunpack.c.l.b16 %v892
    %v925 = vunpack.c.l.b16 %v893
    %v926 = vunpack.c.l.b16 %v894
    %v927 = vunpack.c.l.b16 %v895
    %v928 = vunpack.c.l.b16 %v896
    %v929 = vunpack.c.l.b16 %v897
    %v930 = vunpack.c.l.b16 %v898
    %v931 = vunpack.c.l.b16 %v899
    %v932 = vunpack.c.l.b16 %v900
    %v933 = vunpack.c.l.b16 %v901
    %v934 = vunpack.c.l.b16 %v902
    %v935 = vunpack.c.l.b16 %v903
    %v936 = vunpack.c.l.b16 %v904
    %v937 = vunpack.c.l.b16 %v905
    %v938 = vpack.c.b16 %v923, %v922
    %v939 = vpack.c.b16 %v925, %v924
    %v940 = vpack.c.b16 %v927, %v926
    %v941 = vpack.c.b16 %v929, %v928
    %v942 = vpack.c.b16 %v931, %v930
    %v943 = vpack.c.b16 %v933, %v932
    %v944 = vpack.c.b16 %v935, %v934
    %v945 = vpack.c.b16 %v937, %v936
    %954 = vmatprep.subr.bf16.mxu0 0
    %955 = vmatpush1.bf16.msra.mxu0 %v938
    %956 = vmatprep.subr.bf16.mxu0 0
    %957 = vmatpush1.bf16.msra.mxu0 %v939
    %958 = vmatprep.subr.bf16.mxu0 0
    %959 = vmatpush1.bf16.msra.mxu0 %v940
    %960 = vmatprep.subr.bf16.mxu0 0
    %961 = vmatpush1.bf16.msra.mxu0 %v941
    %962 = vmatprep.subr.bf16.mxu0 0
    %963 = vmatpush1.bf16.msra.mxu0 %v942
    %964 = vmatprep.subr.bf16.mxu0 0
    %965 = vmatpush1.bf16.msra.mxu0 %v943
    %966 = vmatprep.subr.bf16.mxu0 0
    %967 = vmatpush1.bf16.msra.mxu0 %v944
    %968 = vmatprep.subr.bf16.mxu0 0
    %969 = vmatpush1.bf16.msra.mxu0 %v945
    %970 = vmatprep.subr.bf16.mxu0 0
    %971 = vmatpush1.bf16.msra.mxu0 0
    %972 = vmatprep.subr.bf16.mxu0 0
    %973 = vmatpush1.bf16.msra.mxu0 0
    %974 = vmatprep.subr.bf16.mxu0 0
    %975 = vmatpush1.bf16.msra.mxu0 0
    %976 = vmatprep.subr.bf16.mxu0 0
    %977 = vmatpush1.bf16.msra.mxu0 0
    %978 = vmatprep.subr.bf16.mxu0 0
    %979 = vmatpush1.bf16.msra.mxu0 0
    %980 = vmatprep.subr.bf16.mxu0 0
    %981 = vmatpush1.bf16.msra.mxu0 0
    %982 = vmatprep.subr.bf16.mxu0 0
    %983 = vmatpush1.bf16.msra.mxu0 0
    %984 = vmatprep.subr.bf16.mxu0 0
    %985 = vmatpush1.bf16.msra.mxu0 0
    %986 = vmatprep.mubr.bf16.mxu0 0
    %987 = vmatmul.mubr.bf16.gmra.mrb[0].mxu0 %v889
    %v988 = vpop.f32.mrb[0].mxu0
    %v989 = vadd.f32 0.0, %v988
    %v990 = vpop.f32.mrb[0].mxu0
    %v991 = vpop.f32.mrb[0].mxu0
    %v992 = vpop.f32.mrb[0].mxu0
    %993 = vdwg.mxu0
    %v994 = vld [vmem:[%s8] sm:$0x1]
    %v996 = vlaneseq
    %v997 = vshrl.u32 %v996, 7
    %v998 = vsub.s32 0, %v997
    %v999 = vrot.slane %v994, %v998
    %v1001 = vadd.f32 %v989, %v999
    %vm1002 = vcmask 74752
    %1003 = vst.msk [vmem:[#allocation5] sm:$0x3] %vm1002, %v1001
    // Predicated region
    $region42: #{mlp_forward.1} parent=1 // pred_check
      _
    $region43: #{mlp_forward.1} parent=1 // pred_check_branch
      %1005 = sbr.rel (0) target = $region45
    $region44: #{mlp_forward.1} parent=1 // pred_region
      %s1007 = ssub.s32 32, 32
      %1008 = vsyncadd [#allocation4], %s1007
      %s1010 = sshll.u32 [#allocation5], 4
      %s1011 = int_to_ptr.vmem [resolvable:$true] %s1010
      %1013 = dma.vmem_to_hbm [thread:$0]  %s1011, 32, %s9, [#allocation4]
    $region45: #{mlp_forward.1} parent=1 // pred_fallthru
      _
    // Predicated region
    $region46: #{mlp_forward.1} parent=1 // pred_check
      _
    $region47: #{mlp_forward.1} parent=1 // pred_check_branch
      %1015 = sbr.rel (0) target = $region49
    $region48: #{mlp_forward.1} parent=1 // pred_region
      %1016 = dma.done [#allocation4], 32
    $region49: #{mlp_forward.1} parent=1 // pred_fallthru
      _
    %1017 = vsyncpa [#allocation3], 1
    %1018 = vsyncpa [#allocation4], 1

</llo_original>
